<compile_context>
chip_gen: v5e
topology: v5e:2x2
jax: 0.10.0
libtpu: 0.0.40
codegen_flags: <defaults>
</compile_context>

<pallas_src>
import jax
import jax.numpy as jnp
from jax.experimental import pallas as pl
from jax.experimental.pallas import tpu as pltpu


_TARGET_DMA_BYTES = 2 * 1024 * 1024   # ~2 MiB of payload per outstanding DMA
_MAX_OUTSTANDING_DMAS = 8             # concurrent DMA-engine transfers
_SUBLANE_PACK = {4: 8, 2: 16, 1: 32}  # sublane-tile rows per element size


def _chunk_bounds(extent, n_chunks, align):
    """Split [0, extent) into <= n_chunks contiguous (start, size) chunks.

    Interior boundaries are rounded down to `align`, so every chunk except
    possibly the last begins on a sublane-tile boundary of the HBM layout.
    """
    bounds = []
    prev = 0
    for c in range(1, n_chunks + 1):
        if c == n_chunks:
            end = extent
        else:
            end = ((extent * c) // n_chunks) // align * align
            end = min(max(end, prev), extent)
        if end > prev:
            bounds.append((prev, end - prev))
        prev = end
    return bounds


def _build_dma_identity_kernel(bounds, ndim):
    """Kernel: copy each chunk HBM->HBM with its own DMA; no VMEM, no VPU."""

    def kernel(x_hbm, o_hbm, sems):
        copies = []
        # Issue every chunk's DMA first so multiple engines stream in parallel.
        for c, (start, size) in enumerate(bounds):
            idx = (pl.ds(start, size),) + (slice(None),) * (ndim - 1)
            cp = pltpu.make_async_copy(x_hbm.at[idx], o_hbm.at[idx], sems.at[c])
            cp.start()
            copies.append(cp)
        # Then drain them all.
        for cp in copies:
            cp.wait()

    return kernel


def resnet50_extractor_forward(x):
    """Pallas implementation of ResNet50Extractor.forward (identity copy).

    Pure DMA-engine HBM->HBM copy; output equals input exactly (any shape,
    any dtype).  Note: if aliasing is acceptable at the call site, the truly
    optimal implementation of this identity module is just `return x`.
    """
    orig_shape = x.shape
    if x.size == 0:
        return x

    itemsize = jnp.dtype(x.dtype).itemsize
    if x.ndim >= 3:
        # Collapse leading dims (layout-preserving); chunk boundaries then fall
        # on whole (H, W) slabs, i.e. always on HBM tile boundaries.
        work = x.reshape((-1,) + x.shape[-2:])
        align = 1
    elif x.ndim == 2:
        work = x
        align = _SUBLANE_PACK.get(itemsize, 8)
    else:
        # 0-D / 1-D: trivially small; present as a single-row 2-D array.
        work = x.reshape(1, x.size)
        align = 1

    total_bytes = work.size * itemsize
    want = max(1, min(_MAX_OUTSTANDING_DMAS,
                      -(-total_bytes // _TARGET_DMA_BYTES)))  # ceil-div
    bounds = _chunk_bounds(work.shape[0], want, align)

    out = pl.pallas_call(
        _build_dma_identity_kernel(bounds, work.ndim),
        out_shape=jax.ShapeDtypeStruct(work.shape, work.dtype),
        in_specs=[pl.BlockSpec(memory_space=pl.ANY)],
        out_specs=pl.BlockSpec(memory_space=pl.ANY),
        scratch_shapes=[pltpu.SemaphoreType.DMA((len(bounds),))],
    )(work)

    return out.reshape(orig_shape)


if __name__ == "__main__":
    key = jax.random.PRNGKey(0)

    # Small NCHW input consistent with an image-feature-extractor module.
    x = jax.random.normal(key, (2, 4, 16, 16), dtype=jnp.float32)
    y = jax.block_until_ready(resnet50_extractor_forward(x))
    assert y.shape == x.shape and y.dtype == x.dtype
    assert bool(jnp.all(y == x))

    # Larger ResNet-stage-sized activation: exercises the multi-DMA path
    # (4 concurrent ~1.6 MB chunk transfers along the collapsed N*C axis).
    x_big = jax.random.normal(jax.random.PRNGKey(1), (2, 256, 56, 56),
                              dtype=jnp.float32)
    y_big = jax.block_until_ready(resnet50_extractor_forward(x_big))
    assert y_big.shape == x_big.shape and bool(jnp.all(y_big == x_big))

    # 2-D path with a row count that is not a multiple of the sublane pack.
    x_2d = jax.random.normal(jax.random.PRNGKey(2), (13, 384),
                             dtype=jnp.float32)
    y_2d = jax.block_until_ready(resnet50_extractor_forward(x_2d))
    assert y_2d.shape == x_2d.shape and bool(jnp.all(y_2d == x_2d))

    print("KERNEL_OK")
</pallas_src>

<mosaic_0001>
module attributes {stable_mosaic.version = 11 : i64} {
  func.func @kernel(%arg0: memref<8x16x16xf32, #tpu.memory_space<any>>, %arg1: memref<8x16x16xf32, #tpu.memory_space<any>>, %arg2: memref<1x!tpu.dma_semaphore, #tpu.memory_space<semaphore_mem>>) attributes {dimension_semantics = [], scalar_prefetch = 0 : i64, scratch_operands = 1 : i64, tpu.core_type = #tpu.core_type<tc>} {
    %c0_i32 = arith.constant 0 : i32
    %c0_i32_0 = arith.constant 0 : i32
    %c0_i32_1 = arith.constant 0 : i32
    %c0_i32_2 = arith.constant 0 : i32
    %0 = tpu.memref_slice %arg0[%c0_i32_0, %c0_i32_1, %c0_i32_2] : memref<8x16x16xf32, #tpu.memory_space<any>> -> memref<8x16x16xf32, #tpu.memory_space<any>>
    %c0_i32_3 = arith.constant 0 : i32
    %c0_i32_4 = arith.constant 0 : i32
    %c0_i32_5 = arith.constant 0 : i32
    %1 = tpu.memref_slice %arg1[%c0_i32_3, %c0_i32_4, %c0_i32_5] : memref<8x16x16xf32, #tpu.memory_space<any>> -> memref<8x16x16xf32, #tpu.memory_space<any>>
    %2 = tpu.memref_slice %arg2[%c0_i32] : memref<1x!tpu.dma_semaphore, #tpu.memory_space<semaphore_mem>> -> memref<1x!tpu.dma_semaphore, #tpu.memory_space<semaphore_mem>>
    %3 = tpu.memref_squeeze %2 : memref<1x!tpu.dma_semaphore, #tpu.memory_space<semaphore_mem>> -> memref<!tpu.dma_semaphore, #tpu.memory_space<semaphore_mem>>
    tpu.enqueue_dma source(%0 : memref<8x16x16xf32, #tpu.memory_space<any>>) target(%1 : memref<8x16x16xf32, #tpu.memory_space<any>>) target_semaphore(%3 : memref<!tpu.dma_semaphore, #tpu.memory_space<semaphore_mem>>)
    %c0_i32_6 = arith.constant 0 : i32
    %c0_i32_7 = arith.constant 0 : i32
    %c0_i32_8 = arith.constant 0 : i32
    %c0_i32_9 = arith.constant 0 : i32
    %4 = tpu.memref_slice %arg0[%c0_i32_7, %c0_i32_8, %c0_i32_9] : memref<8x16x16xf32, #tpu.memory_space<any>> -> memref<8x16x16xf32, #tpu.memory_space<any>>
    %c0_i32_10 = arith.constant 0 : i32
    %c0_i32_11 = arith.constant 0 : i32
    %c0_i32_12 = arith.constant 0 : i32
    %5 = tpu.memref_slice %arg1[%c0_i32_10, %c0_i32_11, %c0_i32_12] : memref<8x16x16xf32, #tpu.memory_space<any>> -> memref<8x16x16xf32, #tpu.memory_space<any>>
    %6 = tpu.memref_slice %arg2[%c0_i32_6] : memref<1x!tpu.dma_semaphore, #tpu.memory_space<semaphore_mem>> -> memref<1x!tpu.dma_semaphore, #tpu.memory_space<semaphore_mem>>
    %7 = tpu.memref_squeeze %6 : memref<1x!tpu.dma_semaphore, #tpu.memory_space<semaphore_mem>> -> memref<!tpu.dma_semaphore, #tpu.memory_space<semaphore_mem>>
    tpu.wait_dma2 semaphore(%7 : memref<!tpu.dma_semaphore, #tpu.memory_space<semaphore_mem>>) src(%4 : memref<8x16x16xf32, #tpu.memory_space<any>>) dst(%5 : memref<8x16x16xf32, #tpu.memory_space<any>>)
    return
  }
}

</mosaic_0001>

<llo_original>
// kernel: tpu_custom_call.1
$region0: #{tpu_custom_call.1}
  #allocation0 [shape = 'u32[]', space=smem, size = 0x4, offset = 0x4, fixed_abs, tag = 'smem constant byte address 0x4 - core index']
  #allocation1 [shape = 'u32[72,128]{1,0:T(1,128)}', space=vmem, size = 0x9000, scoped, tag = 'internal scratch']
  #allocation2 [shape = 's32[1]{0}', space=sflag, size = 0x4, scoped, tag = 'scratch operand']
  #allocation3 [shape = 's32[]', space=sflag, size = 0x4, offset = 0, fixed_abs, tag = 'sflag constant byte address 0x0 - dummy sync flag']
  #allocation4 [shape = 'u32[0]{0}', space=smem, size = 0, offset = 0, fixed_abs, tag = 'smem constant byte address 0x0 - null']
  %s0 = inlined_call_operand.hbm [shape: f32[8,16,16], index: 0, kind: input, shape index: {}]
  %s1 = inlined_call_operand.hbm [shape: f32[8,16,16], index: 1, kind: output, shape index: {}]
  %s2 = sld [smem:[#allocation0]]
  $region2: #{tpu_custom_call.1} parent=0
    _
  %s4 = ssub.s32 1, %s2
  %s5 = scalar_select 0, %s4, %s2
  %s7 = sshll.u32 1, 14
  %s8 = sxor.u32 4294967295, %s7
  %s10 = sshll.u32 %s0, 4
  %s11 = int_to_ptr.hbm [resolvable:$true] %s10
  %s12 = sshll.u32 %s1, 4
  %s13 = int_to_ptr.hbm [resolvable:$true] %s12
  %16 = dma.general %s11, 2048, %s13, [#allocation2], [#allocation3], [#allocation4], 0, 0
  %s17 = smul.u32 8, 16
  %s18 = smul.u32 %s17, 1
  %s19 = sshll.u32 %s18, 4
  %20 = dma.done [#allocation2], %s19
  %21 = vsyncmov [#allocation2]
  %s22 = vpop.sfrf %21
  %p23 = scmp.eq.s32.totalorder %s22, 0
  %p24 = pneg %p23
  %26 = shalt.err (%p24)

</llo_original>
